<compile_context>
chip_gen: v6e
topology: v6e:2x2x1
jax: 0.10.0
libtpu: 0.0.40
codegen_flags: <defaults>
</compile_context>

<pallas_src>
import functools

import jax
import jax.numpy as jnp
from jax.experimental import pallas as pl
from jax.experimental.pallas import tpu as pltpu

N_EMBD = 64
HIDDEN = 256
LN_EPS = 1e-5


def _round_up(n, m):
    return ((n + m - 1) // m) * m


def _ffn_kernel(x_ref, w1_ref, b1_ref, w2_ref, b2_ref, g_ref, beta_ref, o_ref):
    # x_ref: (TR, C) bf16; w1_ref: (C, H) bf16; b1_ref: (1, H) f32;
    # w2_ref: (H, C) bf16; b2_ref/g_ref/beta_ref: (1, C) f32; o_ref: (TR, C) f32.

    # conv1 (kernel_size=1) == matmul; bf16 operands, f32 accumulation (MXU).
    h = jnp.dot(x_ref[...], w1_ref[...], preferred_element_type=jnp.float32)
    # bias + ReLU in f32 (VPU), then stage the hidden activation in bf16:
    # (TR, 256) >> vreg file, so it round-trips VMEM; bf16 halves that traffic
    # and the second MXU dot consumes bf16 anyway.
    h = jnp.maximum(h + b1_ref[...], 0.0).astype(jnp.bfloat16)

    # conv2 (kernel_size=1) == matmul.
    y = jnp.dot(h, w2_ref[...], preferred_element_type=jnp.float32)
    # bias + residual; re-read x from VMEM (vld slots) and upcast to f32.
    y = y + b2_ref[...] + x_ref[...].astype(jnp.float32)

    # LayerNorm over the embedding axis, f32 throughout. One-pass moments
    # (E[y^2] - mean^2); revert to two-pass (y-mean)^2 if accuracy drifts.
    mean = jnp.mean(y, axis=-1, keepdims=True)
    mean_sq = jnp.mean(y * y, axis=-1, keepdims=True)
    var = mean_sq - mean * mean
    scale = jax.lax.rsqrt(var + LN_EPS) * g_ref[...]   # gamma folded in
    o_ref[...] = ((y - mean) * scale + beta_ref[...]).astype(o_ref.dtype)


@functools.partial(jax.jit, static_argnames=("row_tile",))
def feed_forward(x, w1, b1, w2, b2, gamma, beta, *, row_tile=4096):
    """x: (B, T, n_embd) f32. Returns (B, T, n_embd) f32."""
    B, T, C = x.shape
    assert C == N_EMBD
    rows = B * T

    # Tile balancing:
    #  - n_tiles is always even and >= 2 so the "parallel" grid axis shards
    #    evenly across both v7x TensorCores (no effect on v5e/v6e);
    #  - tile ~= rows / n_tiles (8-aligned) so the last tile isn't mostly pad.
    n_tiles = max(2, -(-rows // row_tile))
    if n_tiles % 2:
        n_tiles += 1
    tile = _round_up(-(-rows // n_tiles), 8)
    padded_rows = n_tiles * tile

    # bf16 activation input (halves HBM read traffic); output stays f32.
    x2d = x.reshape(rows, C).astype(jnp.bfloat16)
    if padded_rows != rows:
        x2d = jnp.pad(x2d, ((0, padded_rows - rows), (0, 0)))

    # bf16 weights for the MXU (f32 accumulation inside the kernel).
    w1_bf = w1.astype(jnp.bfloat16)
    w2_bf = w2.astype(jnp.bfloat16)

    # 2-D biases / LN params so they sit in a (sublane, lane) layout.
    b1_2d = b1.reshape(1, HIDDEN)
    b2_2d = b2.reshape(1, C)
    g_2d = gamma.reshape(1, C)
    beta_2d = beta.reshape(1, C)

    out2d = pl.pallas_call(
        _ffn_kernel,
        out_shape=jax.ShapeDtypeStruct((padded_rows, C), x.dtype),
        grid_spec=pltpu.PrefetchScalarGridSpec(
            num_scalar_prefetch=0,
            grid=(n_tiles,),
            in_specs=[
                pl.BlockSpec((tile, C), lambda i: (i, 0)),      # x tile (bf16)
                pl.BlockSpec((C, HIDDEN), lambda i: (0, 0)),    # w1 (resident, bf16)
                pl.BlockSpec((1, HIDDEN), lambda i: (0, 0)),    # b1
                pl.BlockSpec((HIDDEN, C), lambda i: (0, 0)),    # w2 (resident, bf16)
                pl.BlockSpec((1, C), lambda i: (0, 0)),         # b2
                pl.BlockSpec((1, C), lambda i: (0, 0)),         # gamma
                pl.BlockSpec((1, C), lambda i: (0, 0)),         # beta
            ],
            out_specs=pl.BlockSpec((tile, C), lambda i: (i, 0)),
        ),
        compiler_params=pltpu.CompilerParams(
            dimension_semantics=("parallel",),   # megacore / v7x TC sharding
            vmem_limit_bytes=32 * 1024 * 1024,   # safe even on v7x's 64 MiB VMEM
        ),
    )(x2d, w1_bf, b1_2d, w2_bf, b2_2d, g_2d, beta_2d)

    return out2d[:rows].reshape(B, T, C)


def init_params(key):
    """Deterministic synthetic parameters matching the PyTorch module's shapes.

    conv1: Conv1d(64, 256, k=1) -> stored transposed as w1: (64, 256) for x @ w1.
    conv2: Conv1d(256, 64, k=1) -> w2: (256, 64), b2: (64,)
    layer_norm: gamma/beta (64,)
    """
    k1, k2, k3, k4 = jax.random.split(key, 4)
    s1 = 1.0 / jnp.sqrt(N_EMBD)
    s2 = 1.0 / jnp.sqrt(HIDDEN)
    w1 = jax.random.uniform(k1, (N_EMBD, HIDDEN), jnp.float32, -s1, s1)
    b1 = jax.random.uniform(k2, (HIDDEN,), jnp.float32, -s1, s1)
    w2 = jax.random.uniform(k3, (HIDDEN, N_EMBD), jnp.float32, -s2, s2)
    b2 = jax.random.uniform(k4, (N_EMBD,), jnp.float32, -s2, s2)
    gamma = jnp.ones((N_EMBD,), jnp.float32)
    beta = jnp.zeros((N_EMBD,), jnp.float32)
    return w1, b1, w2, b2, gamma, beta


def reference(x, w1, b1, w2, b2, gamma, beta):
    h = jnp.maximum(x @ w1 + b1, 0.0)
    y = h @ w2 + b2 + x
    mean = jnp.mean(y, axis=-1, keepdims=True)
    var = jnp.mean((y - mean) ** 2, axis=-1, keepdims=True)
    return (y - mean) / jnp.sqrt(var + LN_EPS) * gamma + beta


if __name__ == "__main__":
    key = jax.random.PRNGKey(0)
    kx, kp = jax.random.split(key)

    B, T = 2, 8  # small synthetic shapes; embedding dim fixed to n_embd=64
    x = jax.random.normal(kx, (B, T, N_EMBD), jnp.float32)
    params = init_params(kp)

    out = feed_forward(x, *params)
    out = jax.block_until_ready(out)

    ref = reference(x, *params)
    assert out.shape == (B, T, N_EMBD)
    # bf16 activations/weights on the MXU (f32 accumulation) => looser tolerance.
    assert jnp.allclose(out, ref, atol=5e-2, rtol=5e-2), "mismatch vs reference"

    print("KERNEL_OK")
</pallas_src>

<mosaic_0001>
module attributes {stable_mosaic.version = 11 : i64} {
  func.func @_ffn_kernel(%arg0: i32, %arg1: memref<8x64xbf16, #tpu.memory_space<vmem>>, %arg2: memref<64x256xbf16, #tpu.memory_space<vmem>>, %arg3: memref<1x256xf32, #tpu.memory_space<vmem>>, %arg4: memref<256x64xbf16, #tpu.memory_space<vmem>>, %arg5: memref<1x64xf32, #tpu.memory_space<vmem>>, %arg6: memref<1x64xf32, #tpu.memory_space<vmem>>, %arg7: memref<1x64xf32, #tpu.memory_space<vmem>>, %arg8: memref<8x64xf32, #tpu.memory_space<vmem>>) attributes {dimension_semantics = [#tpu.dimension_semantics<parallel>], iteration_bounds = array<i64: 2>, scalar_prefetch = 0 : i64, scratch_operands = 0 : i64, tpu.core_type = #tpu.core_type<tc>, window_params = [{transform_indices = @transform_0, window_bounds = array<i64: 8, 64>}, {pipeline_mode = #tpu.pipeline_mode<synchronous>, transform_indices = @transform_1, window_bounds = array<i64: 64, 256>}, {pipeline_mode = #tpu.pipeline_mode<synchronous>, transform_indices = @transform_2, window_bounds = array<i64: 1, 256>}, {pipeline_mode = #tpu.pipeline_mode<synchronous>, transform_indices = @transform_3, window_bounds = array<i64: 256, 64>}, {pipeline_mode = #tpu.pipeline_mode<synchronous>, transform_indices = @transform_4, window_bounds = array<i64: 1, 64>}, {pipeline_mode = #tpu.pipeline_mode<synchronous>, transform_indices = @transform_5, window_bounds = array<i64: 1, 64>}, {pipeline_mode = #tpu.pipeline_mode<synchronous>, transform_indices = @transform_6, window_bounds = array<i64: 1, 64>}, {transform_indices = @transform_7, window_bounds = array<i64: 8, 64>}]} {
    %c0 = arith.constant 0 : index
    %c0_0 = arith.constant 0 : index
    %0 = vector.load %arg1[%c0, %c0_0] : memref<8x64xbf16, #tpu.memory_space<vmem>>, vector<8x64xbf16>
    %c0_1 = arith.constant 0 : index
    %c0_2 = arith.constant 0 : index
    %1 = vector.load %arg2[%c0_1, %c0_2] : memref<64x256xbf16, #tpu.memory_space<vmem>>, vector<64x256xbf16>
    %cst = arith.constant dense<0.000000e+00> : vector<8x256xf32>
    %2 = tpu.matmul %0, %1, %cst {dimension_numbers = #tpu.dot_dimension_numbers<[1], [0], [0], [1], [0, 0, 1, 1], [], []>} : vector<8x64xbf16>, vector<64x256xbf16>, vector<8x256xf32> -> vector<8x256xf32>
    %c0_3 = arith.constant 0 : index
    %c0_4 = arith.constant 0 : index
    %3 = vector.load %arg3[%c0_3, %c0_4] : memref<1x256xf32, #tpu.memory_space<vmem>>, vector<1x256xf32>
    %4 = vector.broadcast %3 : vector<1x256xf32> to vector<8x256xf32>
    %5 = arith.addf %2, %4 : vector<8x256xf32>
    %cst_5 = arith.constant 0.000000e+00 : f32
    %6 = vector.broadcast %cst_5 : f32 to vector<8x256xf32>
    %7 = arith.maximumf %5, %6 : vector<8x256xf32>
    %8 = arith.truncf %7 : vector<8x256xf32> to vector<8x256xbf16>
    %c0_6 = arith.constant 0 : index
    %c0_7 = arith.constant 0 : index
    %9 = vector.load %arg4[%c0_6, %c0_7] : memref<256x64xbf16, #tpu.memory_space<vmem>>, vector<256x64xbf16>
    %cst_8 = arith.constant dense<0.000000e+00> : vector<8x64xf32>
    %10 = tpu.matmul %8, %9, %cst_8 {dimension_numbers = #tpu.dot_dimension_numbers<[1], [0], [0], [1], [0, 0, 1, 1], [], []>} : vector<8x256xbf16>, vector<256x64xbf16>, vector<8x64xf32> -> vector<8x64xf32>
    %c0_9 = arith.constant 0 : index
    %c0_10 = arith.constant 0 : index
    %11 = vector.load %arg5[%c0_9, %c0_10] : memref<1x64xf32, #tpu.memory_space<vmem>>, vector<1x64xf32>
    %12 = vector.broadcast %11 : vector<1x64xf32> to vector<8x64xf32>
    %13 = arith.addf %10, %12 : vector<8x64xf32>
    %c0_11 = arith.constant 0 : index
    %c0_12 = arith.constant 0 : index
    %14 = vector.load %arg1[%c0_11, %c0_12] : memref<8x64xbf16, #tpu.memory_space<vmem>>, vector<8x64xbf16>
    %15 = arith.extf %14 : vector<8x64xbf16> to vector<8x64xf32>
    %16 = arith.addf %13, %15 : vector<8x64xf32>
    %cst_13 = arith.constant dense<0.000000e+00> : vector<8xf32>
    %17 = vector.multi_reduction <add>, %16, %cst_13 [1] : vector<8x64xf32> to vector<8xf32>
    %18 = vector.shape_cast %17 : vector<8xf32> to vector<8x1xf32>
    %cst_14 = arith.constant 6.400000e+01 : f32
    %19 = vector.broadcast %cst_14 : f32 to vector<8x1xf32>
    %20 = arith.divf %18, %19 : vector<8x1xf32>
    %21 = arith.mulf %16, %16 : vector<8x64xf32>
    %cst_15 = arith.constant dense<0.000000e+00> : vector<8xf32>
    %22 = vector.multi_reduction <add>, %21, %cst_15 [1] : vector<8x64xf32> to vector<8xf32>
    %23 = vector.shape_cast %22 : vector<8xf32> to vector<8x1xf32>
    %cst_16 = arith.constant 6.400000e+01 : f32
    %24 = vector.broadcast %cst_16 : f32 to vector<8x1xf32>
    %25 = arith.divf %23, %24 : vector<8x1xf32>
    %26 = arith.mulf %20, %20 : vector<8x1xf32>
    %27 = arith.subf %25, %26 : vector<8x1xf32>
    %cst_17 = arith.constant 9.99999974E-6 : f32
    %28 = vector.broadcast %cst_17 : f32 to vector<8x1xf32>
    %29 = arith.addf %27, %28 : vector<8x1xf32>
    %30 = math.rsqrt %29 : vector<8x1xf32>
    %c0_18 = arith.constant 0 : index
    %c0_19 = arith.constant 0 : index
    %31 = vector.load %arg6[%c0_18, %c0_19] : memref<1x64xf32, #tpu.memory_space<vmem>>, vector<1x64xf32>
    %32 = vector.broadcast %30 : vector<8x1xf32> to vector<8x64xf32>
    %33 = vector.broadcast %31 : vector<1x64xf32> to vector<8x64xf32>
    %34 = arith.mulf %32, %33 : vector<8x64xf32>
    %35 = vector.broadcast %20 : vector<8x1xf32> to vector<8x64xf32>
    %36 = arith.subf %16, %35 : vector<8x64xf32>
    %37 = arith.mulf %36, %34 : vector<8x64xf32>
    %c0_20 = arith.constant 0 : index
    %c0_21 = arith.constant 0 : index
    %38 = vector.load %arg7[%c0_20, %c0_21] : memref<1x64xf32, #tpu.memory_space<vmem>>, vector<1x64xf32>
    %39 = vector.broadcast %38 : vector<1x64xf32> to vector<8x64xf32>
    %40 = arith.addf %37, %39 : vector<8x64xf32>
    %c0_22 = arith.constant 0 : index
    %c0_23 = arith.constant 0 : index
    %41 = vector.load %arg8[%c0_22, %c0_23] : memref<8x64xf32, #tpu.memory_space<vmem>>, vector<8x64xf32>
    tpu.vector_store %arg8[%c0_22, %c0_23], %40 {strides = array<i32>} : memref<8x64xf32, #tpu.memory_space<vmem>>, vector<8x64xf32>,
    return
  }
  func.func @transform_0(%arg0: i32) -> (i32, i32) {
    %c0_i32 = arith.constant 0 : i32
    %c0_i32_0 = arith.constant 0 : i32
    return %arg0, %c0_i32 : i32, i32
  }
  func.func @transform_1(%arg0: i32) -> (i32, i32) {
    %c0_i32 = arith.constant 0 : i32
    %c0_i32_0 = arith.constant 0 : i32
    %c0_i32_1 = arith.constant 0 : i32
    return %c0_i32, %c0_i32_0 : i32, i32
  }
  func.func @transform_2(%arg0: i32) -> (i32, i32) {
    %c0_i32 = arith.constant 0 : i32
    %c0_i32_0 = arith.constant 0 : i32
    %c0_i32_1 = arith.constant 0 : i32
    return %c0_i32, %c0_i32_0 : i32, i32
  }
  func.func @transform_3(%arg0: i32) -> (i32, i32) {
    %c0_i32 = arith.constant 0 : i32
    %c0_i32_0 = arith.constant 0 : i32
    %c0_i32_1 = arith.constant 0 : i32
    return %c0_i32, %c0_i32_0 : i32, i32
  }
  func.func @transform_4(%arg0: i32) -> (i32, i32) {
    %c0_i32 = arith.constant 0 : i32
    %c0_i32_0 = arith.constant 0 : i32
    %c0_i32_1 = arith.constant 0 : i32
    return %c0_i32, %c0_i32_0 : i32, i32
  }
  func.func @transform_5(%arg0: i32) -> (i32, i32) {
    %c0_i32 = arith.constant 0 : i32
    %c0_i32_0 = arith.constant 0 : i32
    %c0_i32_1 = arith.constant 0 : i32
    return %c0_i32, %c0_i32_0 : i32, i32
  }
  func.func @transform_6(%arg0: i32) -> (i32, i32) {
    %c0_i32 = arith.constant 0 : i32
    %c0_i32_0 = arith.constant 0 : i32
    %c0_i32_1 = arith.constant 0 : i32
    return %c0_i32, %c0_i32_0 : i32, i32
  }
  func.func @transform_7(%arg0: i32) -> (i32, i32) {
    %c0_i32 = arith.constant 0 : i32
    %c0_i32_0 = arith.constant 0 : i32
    return %arg0, %c0_i32 : i32, i32
  }
}

</mosaic_0001>

<llo_original>
// kernel: feed_forward.1
$region0: #{feed_forward.1}
  #allocation0 [shape = 'u32[]', space=smem, size = 0x4, offset = 0x4, fixed_abs, tag = 'smem constant byte address 0x4 - core index']
  #allocation1 [shape = 'u32[144,128]{1,0:T(1,128)}', space=vmem, size = 0x12000, scoped, tag = 'internal scratch']
  %s0 = inlined_call_operand.vmem [shape: bf16[16,64], index: 0, kind: input, shape index: {}]
  %s1 = inlined_call_operand.vmem [shape: bf16[64,256], index: 1, kind: input, shape index: {}]
  %s2 = inlined_call_operand.vmem [shape: f32[1,256], index: 2, kind: input, shape index: {}]
  %s3 = inlined_call_operand.vmem [shape: bf16[256,64], index: 3, kind: input, shape index: {}]
  %s4 = inlined_call_operand.vmem [shape: f32[1,64], index: 4, kind: input, shape index: {}]
  %s5 = inlined_call_operand.vmem [shape: f32[1,64], index: 5, kind: input, shape index: {}]
  %s6 = inlined_call_operand.vmem [shape: f32[1,64], index: 6, kind: input, shape index: {}]
  %s7 = inlined_call_operand.hbm [shape: f32[16,64], index: 7, kind: output, shape index: {}]
  %s8 = sld [smem:[#allocation0]]
  $region61: #{feed_forward.1} parent=0
    _
  %s10 = ssub.s32 1, %s8
  %s11 = scalar_select 0, %s10, %s8
  $region1: #{feed_forward.1} parent=0
    #allocation2 [shape = 'u8[8192]{0}', space=vmem, size = 0x2000, scoped, tag = 'output window, operand 0']
    #allocation3 [shape = 's32[2]{0}', space=sflag, size = 0x8, scoped, tag = 'scoped memory for feed_forward.1']
    %12 = vsyncpa [#allocation3], 0
    %s13 = scalar_lea.sflag [#allocation3], 1
    %14 = vsyncpa %s13, 0
    loop: start=0, step=1, limit=4
    $region2: #{feed_forward.1} parent=1 // loop_pre_header
      _
    $region3: #{feed_forward.1} parent=1 // loop_header
      %s16 = sphi 0, %s20
      %p17 = scmp.ge.s32.totalorder %s16, 4
      %s26 = sphi 0, %s28
      %s29 = sphi 0, %s26
      %s30 = sphi 0, %s29
      %s46 = sphi 0, %s30
      %s50 = sphi 0, %s50
      %s52 = sphi 0, %s50
      %s53 = sphi 0, %s52
      %s67 = sphi 0, %s53
      %s71 = sphi 0, %s71
      %s73 = sphi 0, %s71
      %s74 = sphi 0, %s73
      %s88 = sphi 0, %s74
      %s92 = sphi 0, %s92
      %s94 = sphi 0, %s92
      %s95 = sphi 0, %s94
      %s109 = sphi 0, %s95
      %s113 = sphi 0, %s113
      %s115 = sphi 0, %s113
      %s116 = sphi 0, %s115
      %s130 = sphi 0, %s116
      %s134 = sphi 0, %s134
      %s136 = sphi 0, %s134
      %s137 = sphi 0, %s136
      %s151 = sphi 0, %s137
      %s155 = sphi 0, %s155
      %s157 = sphi 0, %s155
      %s158 = sphi 0, %s157
      %s172 = sphi 0, %s158
      %s178 = sphi 0, %s180
      %s181 = sphi 0, %s178
      %s182 = sphi 0, %s181
      %s198 = sphi 0, %s182
    $region4: #{feed_forward.1} parent=1 // loop_header_branch
      %19 = sbr.rel (%p17) target = $region8
    $region5: #{feed_forward.1} parent=1 // loop_body
      %s21 = ssub.s32 %s16, 1
      %s22 = ssub.s32 %s16, 2
      %s23 = sadd.s32 %s16, 1
      %s24 = ssub.s32 %s16, %s23
      %p25 = scmp.eq.s32.totalorder %s24, 0
      %s27 = sadd.s32 %s26, 1
      %s28 = scalar_select %p25, %s26, %s27
      %p31 = pneg %p25
      %p32 = scmp.eq.s32.totalorder %s16, 1
      %p33 = por %p31, %p32
      %p34 = scmp.ne.s32.totalorder %s26, %s29
      %p35 = scmp.eq.s32.totalorder %s16, 0
      %p36 = por %p34, %p35
      %p37 = scmp.ne.s32.totalorder %s26, %s29
      %p38 = scmp.eq.s32.totalorder %s21, 1
      %p39 = por %p37, %p38
      %p40 = scmp.ne.s32.totalorder %s29, %s30
      %p41 = scmp.eq.s32.totalorder %s21, 0
      %p42 = por %p40, %p41
      %p43 = scmp.ne.s32.totalorder %s29, %s30
      %p44 = scmp.eq.s32.totalorder %s22, 1
      %p45 = por %p43, %p44
      %p47 = scmp.ne.s32.totalorder %s30, %s46
      %p48 = scmp.eq.s32.totalorder %s22, 0
      %p49 = por %p47, %p48
      %s51 = sadd.s32 %s50, 1
      %p54 = scmp.eq.s32.totalorder %s16, 1
      %p55 = scmp.ne.s32.totalorder %s50, %s52
      %p56 = scmp.eq.s32.totalorder %s16, 0
      %p57 = por %p55, %p56
      %p58 = scmp.ne.s32.totalorder %s50, %s52
      %p59 = scmp.eq.s32.totalorder %s21, 1
      %p60 = por %p58, %p59
      %p61 = scmp.ne.s32.totalorder %s52, %s53
      %p62 = scmp.eq.s32.totalorder %s21, 0
      %p63 = por %p61, %p62
      %p64 = scmp.ne.s32.totalorder %s52, %s53
      %p65 = scmp.eq.s32.totalorder %s22, 1
      %p66 = por %p64, %p65
      %p68 = scmp.ne.s32.totalorder %s53, %s67
      %p69 = scmp.eq.s32.totalorder %s22, 0
      %p70 = por %p68, %p69
      %s72 = sadd.s32 %s71, 1
      %p75 = scmp.eq.s32.totalorder %s16, 1
      %p76 = scmp.ne.s32.totalorder %s71, %s73
      %p77 = scmp.eq.s32.totalorder %s16, 0
      %p78 = por %p76, %p77
      %p79 = scmp.ne.s32.totalorder %s71, %s73
      %p80 = scmp.eq.s32.totalorder %s21, 1
      %p81 = por %p79, %p80
      %p82 = scmp.ne.s32.totalorder %s73, %s74
      %p83 = scmp.eq.s32.totalorder %s21, 0
      %p84 = por %p82, %p83
      %p85 = scmp.ne.s32.totalorder %s73, %s74
      %p86 = scmp.eq.s32.totalorder %s22, 1
      %p87 = por %p85, %p86
      %p89 = scmp.ne.s32.totalorder %s74, %s88
      %p90 = scmp.eq.s32.totalorder %s22, 0
      %p91 = por %p89, %p90
      %s93 = sadd.s32 %s92, 1
      %p96 = scmp.eq.s32.totalorder %s16, 1
      %p97 = scmp.ne.s32.totalorder %s92, %s94
      %p98 = scmp.eq.s32.totalorder %s16, 0
      %p99 = por %p97, %p98
      %p100 = scmp.ne.s32.totalorder %s92, %s94
      %p101 = scmp.eq.s32.totalorder %s21, 1
      %p102 = por %p100, %p101
      %p103 = scmp.ne.s32.totalorder %s94, %s95
      %p104 = scmp.eq.s32.totalorder %s21, 0
      %p105 = por %p103, %p104
      %p106 = scmp.ne.s32.totalorder %s94, %s95
      %p107 = scmp.eq.s32.totalorder %s22, 1
      %p108 = por %p106, %p107
      %p110 = scmp.ne.s32.totalorder %s95, %s109
      %p111 = scmp.eq.s32.totalorder %s22, 0
      %p112 = por %p110, %p111
      %s114 = sadd.s32 %s113, 1
      %p117 = scmp.eq.s32.totalorder %s16, 1
      %p118 = scmp.ne.s32.totalorder %s113, %s115
      %p119 = scmp.eq.s32.totalorder %s16, 0
      %p120 = por %p118, %p119
      %p121 = scmp.ne.s32.totalorder %s113, %s115
      %p122 = scmp.eq.s32.totalorder %s21, 1
      %p123 = por %p121, %p122
      %p124 = scmp.ne.s32.totalorder %s115, %s116
      %p125 = scmp.eq.s32.totalorder %s21, 0
      %p126 = por %p124, %p125
      %p127 = scmp.ne.s32.totalorder %s115, %s116
      %p128 = scmp.eq.s32.totalorder %s22, 1
      %p129 = por %p127, %p128
      %p131 = scmp.ne.s32.totalorder %s116, %s130
      %p132 = scmp.eq.s32.totalorder %s22, 0
      %p133 = por %p131, %p132
      %s135 = sadd.s32 %s134, 1
      %p138 = scmp.eq.s32.totalorder %s16, 1
      %p139 = scmp.ne.s32.totalorder %s134, %s136
      %p140 = scmp.eq.s32.totalorder %s16, 0
      %p141 = por %p139, %p140
      %p142 = scmp.ne.s32.totalorder %s134, %s136
      %p143 = scmp.eq.s32.totalorder %s21, 1
      %p144 = por %p142, %p143
      %p145 = scmp.ne.s32.totalorder %s136, %s137
      %p146 = scmp.eq.s32.totalorder %s21, 0
      %p147 = por %p145, %p146
      %p148 = scmp.ne.s32.totalorder %s136, %s137
      %p149 = scmp.eq.s32.totalorder %s22, 1
      %p150 = por %p148, %p149
      %p152 = scmp.ne.s32.totalorder %s137, %s151
      %p153 = scmp.eq.s32.totalorder %s22, 0
      %p154 = por %p152, %p153
      %s156 = sadd.s32 %s155, 1
      %p159 = scmp.eq.s32.totalorder %s16, 1
      %p160 = scmp.ne.s32.totalorder %s155, %s157
      %p161 = scmp.eq.s32.totalorder %s16, 0
      %p162 = por %p160, %p161
      %p163 = scmp.ne.s32.totalorder %s155, %s157
      %p164 = scmp.eq.s32.totalorder %s21, 1
      %p165 = por %p163, %p164
      %p166 = scmp.ne.s32.totalorder %s157, %s158
      %p167 = scmp.eq.s32.totalorder %s21, 0
      %p168 = por %p166, %p167
      %p169 = scmp.ne.s32.totalorder %s157, %s158
      %p170 = scmp.eq.s32.totalorder %s22, 1
      %p171 = por %p169, %p170
      %p173 = scmp.ne.s32.totalorder %s158, %s172
      %p174 = scmp.eq.s32.totalorder %s22, 0
      %p175 = por %p173, %p174
      %s176 = ssub.s32 %s16, %s23
      %p177 = scmp.eq.s32.totalorder %s176, 0
      %s179 = sadd.s32 %s178, 1
      %s180 = scalar_select %p177, %s178, %s179
      %p183 = pneg %p177
      %p184 = scmp.eq.s32.totalorder %s16, 1
      %p185 = por %p183, %p184
      %p186 = scmp.ne.s32.totalorder %s178, %s181
      %p187 = scmp.eq.s32.totalorder %s16, 0
      %p188 = por %p186, %p187
      %p189 = scmp.ne.s32.totalorder %s178, %s181
      %p190 = scmp.eq.s32.totalorder %s21, 1
      %p191 = por %p189, %p190
      %p192 = scmp.ne.s32.totalorder %s181, %s182
      %p193 = scmp.eq.s32.totalorder %s21, 0
      %p194 = por %p192, %p193
      %p195 = scmp.ne.s32.totalorder %s181, %s182
      %p196 = scmp.eq.s32.totalorder %s22, 1
      %p197 = por %p195, %p196
      %p199 = scmp.ne.s32.totalorder %s182, %s198
      %p200 = scmp.eq.s32.totalorder %s22, 0
      %p201 = por %p199, %p200
      %p202 = scmp.le.s32.totalorder 1, %s16
      %p203 = scmp.lt.s32.totalorder %s16, 3
      %p204 = pnand %p202, %p203
      %p205 = pneg %p204
      // Predicated region
      $region9: #{feed_forward.1} parent=5 // pred_check
        _
      $region10: #{feed_forward.1} parent=5 // pred_check_branch
        %207 = sbr.rel (%p204) target = $region12
      $region11: #{feed_forward.1} parent=5 // pred_region
        %s208 = ssub.s32 %s16, 1
        // Predicated region
        $region13: #{feed_forward.1} parent=11 // pred_check
          %p209 = pneg %p63
        $region14: #{feed_forward.1} parent=11 // pred_check_branch
          %211 = sbr.rel (%p209) target = $region16
        $region15: #{feed_forward.1} parent=11 // pred_region
          _
        $region16: #{feed_forward.1} parent=11 // pred_fallthru
          _
        // Predicated region
        $region17: #{feed_forward.1} parent=11 // pred_check
          %p212 = pneg %p84
        $region18: #{feed_forward.1} parent=11 // pred_check_branch
          %214 = sbr.rel (%p212) target = $region20
        $region19: #{feed_forward.1} parent=11 // pred_region
          _
        $region20: #{feed_forward.1} parent=11 // pred_fallthru
          _
        // Predicated region
        $region21: #{feed_forward.1} parent=11 // pred_check
          %p215 = pneg %p105
        $region22: #{feed_forward.1} parent=11 // pred_check_branch
          %217 = sbr.rel (%p215) target = $region24
        $region23: #{feed_forward.1} parent=11 // pred_region
          _
        $region24: #{feed_forward.1} parent=11 // pred_fallthru
          _
        // Predicated region
        $region25: #{feed_forward.1} parent=11 // pred_check
          %p218 = pneg %p126
        $region26: #{feed_forward.1} parent=11 // pred_check_branch
          %220 = sbr.rel (%p218) target = $region28
        $region27: #{feed_forward.1} parent=11 // pred_region
          _
        $region28: #{feed_forward.1} parent=11 // pred_fallthru
          _
        // Predicated region
        $region29: #{feed_forward.1} parent=11 // pred_check
          %p221 = pneg %p147
        $region30: #{feed_forward.1} parent=11 // pred_check_branch
          %223 = sbr.rel (%p221) target = $region32
        $region31: #{feed_forward.1} parent=11 // pred_region
          _
        $region32: #{feed_forward.1} parent=11 // pred_fallthru
          _
        // Predicated region
        $region33: #{feed_forward.1} parent=11 // pred_check
          %p224 = pneg %p168
        $region34: #{feed_forward.1} parent=11 // pred_check_branch
          %226 = sbr.rel (%p224) target = $region36
        $region35: #{feed_forward.1} parent=11 // pred_region
          _
        $region36: #{feed_forward.1} parent=11 // pred_fallthru
          _
      $region12: #{feed_forward.1} parent=5 // pred_fallthru
        _
      %p227 = scmp.lt.s32.totalorder %s16, 2
      // Predicated region
      $region37: #{feed_forward.1} parent=5 // pred_check
        %p228 = pneg %p227
      $region38: #{feed_forward.1} parent=5 // pred_check_branch
        %230 = sbr.rel (%p228) target = $region40
      $region39: #{feed_forward.1} parent=5 // pred_region
        // Predicated region
        $region41: #{feed_forward.1} parent=39 // pred_check
          %p231 = pneg %p36
        $region42: #{feed_forward.1} parent=39 // pred_check_branch
          %233 = sbr.rel (%p231) target = $region44
        $region43: #{feed_forward.1} parent=39 // pred_region
          %p234 = scmp.lt.s32.totalorder %s16, 1
          %s235 = scalar_select %p234, %s16, 1
          %s236 = smul.addr %s235, 4
          %s237 = scalar_lea.vmem %s0, %s236
        $region44: #{feed_forward.1} parent=39 // pred_fallthru
          _
      $region40: #{feed_forward.1} parent=5 // pred_fallthru
        _
      %p238 = scmp.le.s32.totalorder 1, %s16
      %p239 = scmp.lt.s32.totalorder %s16, 3
      %p240 = pnand %p238, %p239
      %p241 = pneg %p240
      // Predicated region
      $region45: #{feed_forward.1} parent=5 // pred_check
        _
      $region46: #{feed_forward.1} parent=5 // pred_check_branch
        %243 = sbr.rel (%p240) target = $region48
      $region47: #{feed_forward.1} parent=5 // pred_region
        %s244 = ssub.s32 %s16, 1
        %p245 = scmp.lt.s32.totalorder %s21, 1
        %s246 = scalar_select %p245, %s21, 1
        %s247 = smul.addr %s246, 4
        %s248 = scalar_lea.vmem %s0, %s247
        %p249 = pneg %p42
        %p250 = pneg %p39
        %p251 = pneg %p63
        %p252 = pneg %p60
        %p253 = pneg %p84
        %p254 = pneg %p81
        %p255 = pneg %p105
        %p256 = pneg %p102
        %p257 = pneg %p126
        %p258 = pneg %p123
        %p259 = pneg %p147
        %p260 = pneg %p144
        %p261 = pneg %p168
        %p262 = pneg %p165
        %p263 = pneg %p194
        %p264 = pneg %p191
        %s265 = sand.u32 %s181, 1
        %s266 = scalar_lea.sflag [#allocation3], %s265
        %s267 = sand.u32 %s181, 1
        %s268 = smul.addr %s267, 8
        %s269 = scalar_lea.vmem [#allocation2], %s268
        %p270 = scmp.lt.s32.totalorder %s21, 1
        %s271 = scalar_select %p270, %s21, 1
        %s272 = smul.addr %s271, 4
        %s273 = scalar_lea.vmem %s0, %s272
        %v275 = vld [vmem:[%s273] sm:$0xf]
        %v276 = vld [vmem:[%s1] sm:$0xff]
        %v277 = vld [vmem:[%s1 + $0x8] sm:$0xff]
        %v278 = vld [vmem:[%s1 + $0x10] sm:$0xff]
        %v279 = vld [vmem:[%s1 + $0x18] sm:$0xff]
        %v280 = vld [vmem:[%s1 + $0x20] sm:$0xff]
        %v281 = vld [vmem:[%s1 + $0x28] sm:$0xff]
        %v282 = vld [vmem:[%s1 + $0x30] sm:$0xff]
        %v283 = vld [vmem:[%s1 + $0x38] sm:$0xff]
        %v284 = vld [vmem:[%s2] sm:$0x3]
        %v286 = vlaneseq
        %v287 = vshrl.u32 %v286, 7
        %v288 = vsub.s32 0, %v287
        %v289 = vrot.slane %v284, %v288
        %v290 = vlaneseq
        %v291 = vshrl.u32 %v290, 7
        %v292 = vsub.s32 1, %v291
        %v293 = vrot.slane %v284, %v292
        %v304 = vunpack.c.l.b16 %v276
        %v305 = vunpack.c.h.b16 %v276
        %v306 = vunpack.c.l.b16 %v277
        %v307 = vunpack.c.h.b16 %v277
        %v308 = vunpack.c.l.b16 %v278
        %v309 = vunpack.c.h.b16 %v278
        %v310 = vunpack.c.l.b16 %v279
        %v311 = vunpack.c.h.b16 %v279
        %v312 = vunpack.c.l.b16 %v280
        %v313 = vunpack.c.h.b16 %v280
        %v314 = vunpack.c.l.b16 %v281
        %v315 = vunpack.c.h.b16 %v281
        %v316 = vunpack.c.l.b16 %v282
        %v317 = vunpack.c.h.b16 %v282
        %v318 = vunpack.c.l.b16 %v283
        %v319 = vunpack.c.h.b16 %v283
        %v320 = vpack.c.b16 %v306, %v304
        %v321 = vpack.c.b16 %v307, %v305
        %v322 = vpack.c.b16 %v310, %v308
        %v323 = vpack.c.b16 %v311, %v309
        %v324 = vpack.c.b16 %v314, %v312
        %v325 = vpack.c.b16 %v315, %v313
        %v326 = vpack.c.b16 %v318, %v316
        %v327 = vpack.c.b16 %v319, %v317
        %vm336 = vcmask 523264
        %v338 = vsel %vm336, %v275, 0
        %340 = vmatprep.subr.bf16.mxu0 0
        %341 = vmatpush1.bf16.msra.mxu0 0
        %342 = vmatprep.subr.bf16.mxu0 0
        %343 = vmatpush1.bf16.msra.mxu0 0
        %344 = vmatprep.subr.bf16.mxu0 0
        %345 = vmatpush1.bf16.msra.mxu0 0
        %346 = vmatprep.subr.bf16.mxu0 0
        %347 = vmatpush1.bf16.msra.mxu0 0
        %348 = vmatprep.subr.bf16.mxu0 %v327
        %349 = vmatpush1.bf16.msra.mxu0 %v326
        %350 = vmatprep.subr.bf16.mxu0 %v325
        %351 = vmatpush1.bf16.msra.mxu0 %v324
        %352 = vmatprep.subr.bf16.mxu0 %v323
        %353 = vmatpush1.bf16.msra.mxu0 %v322
        %354 = vmatprep.subr.bf16.mxu0 %v321
        %355 = vmatpush1.bf16.msra.mxu0 %v320
        %356 = vmatprep.subr.bf16.mxu0 0
        %357 = vmatpush2.bf16.msra.mxu0 0
        %358 = vmatprep.subr.bf16.mxu0 0
        %359 = vmatpush2.bf16.msra.mxu0 0
        %360 = vmatprep.subr.bf16.mxu0 0
        %361 = vmatpush2.bf16.msra.mxu0 0
        %362 = vmatprep.subr.bf16.mxu0 0
        %363 = vmatpush2.bf16.msra.mxu0 0
        %364 = vmatprep.subr.bf16.mxu0 0
        %365 = vmatpush2.bf16.msra.mxu0 0
        %366 = vmatprep.subr.bf16.mxu0 0
        %367 = vmatpush2.bf16.msra.mxu0 0
        %368 = vmatprep.subr.bf16.mxu0 0
        %369 = vmatpush2.bf16.msra.mxu0 0
        %370 = vmatprep.subr.bf16.mxu0 0
        %371 = vmatpush2.bf16.msra.mxu0 0
        %372 = vmatprep.mubr.bf16.mxu0 0
        %373 = vmatmul.mubr.bf16.gmra.mxu0 %v338
        %v374 = vpop.f32.mrf.mxu0
        %v375 = vadd.f32 %v289, %v374
        %v376 = vpop.f32.mrf.mxu0
        %v377 = vadd.f32 %v293, %v376
        %v378 = vpop.f32.mrf.mxu0
        %v379 = vpop.f32.mrf.mxu0
        %380 = vdwg.mxu0
        %v381 = vmax.f32 %v375, 0.0
        %v382 = vmax.f32 %v377, 0.0
        %v383 = vpack.c.bf16 %v381, %v381
        %v384 = vpack.c.bf16 %v382, %v382
        %v385 = vld [vmem:[%s3] sm:$0xf]
        %v386 = vld [vmem:[%s3 + $0x4] sm:$0xf]
        %v387 = vld [vmem:[%s3 + $0x8] sm:$0xf]
        %v388 = vld [vmem:[%s3 + $0xc] sm:$0xf]
        %v389 = vld [vmem:[%s3 + $0x10] sm:$0xf]
        %v390 = vld [vmem:[%s3 + $0x14] sm:$0xf]
        %v391 = vld [vmem:[%s3 + $0x18] sm:$0xf]
        %v392 = vld [vmem:[%s3 + $0x1c] sm:$0xf]
        %v393 = vld [vmem:[%s3 + $0x20] sm:$0xf]
        %v394 = vld [vmem:[%s3 + $0x24] sm:$0xf]
        %v395 = vld [vmem:[%s3 + $0x28] sm:$0xf]
        %v396 = vld [vmem:[%s3 + $0x2c] sm:$0xf]
        %v397 = vld [vmem:[%s3 + $0x30] sm:$0xf]
        %v398 = vld [vmem:[%s3 + $0x34] sm:$0xf]
        %v399 = vld [vmem:[%s3 + $0x38] sm:$0xf]
        %v400 = vld [vmem:[%s3 + $0x3c] sm:$0xf]
        %v401 = vld [vmem:[%s3 + $0x40] sm:$0xf]
        %v402 = vld [vmem:[%s3 + $0x44] sm:$0xf]
        %v403 = vld [vmem:[%s3 + $0x48] sm:$0xf]
        %v404 = vld [vmem:[%s3 + $0x4c] sm:$0xf]
        %v405 = vld [vmem:[%s3 + $0x50] sm:$0xf]
        %v406 = vld [vmem:[%s3 + $0x54] sm:$0xf]
        %v407 = vld [vmem:[%s3 + $0x58] sm:$0xf]
        %v408 = vld [vmem:[%s3 + $0x5c] sm:$0xf]
        %v409 = vld [vmem:[%s3 + $0x60] sm:$0xf]
        %v410 = vld [vmem:[%s3 + $0x64] sm:$0xf]
        %v411 = vld [vmem:[%s3 + $0x68] sm:$0xf]
        %v412 = vld [vmem:[%s3 + $0x6c] sm:$0xf]
        %v413 = vld [vmem:[%s3 + $0x70] sm:$0xf]
        %v414 = vld [vmem:[%s3 + $0x74] sm:$0xf]
        %v415 = vld [vmem:[%s3 + $0x78] sm:$0xf]
        %v416 = vld [vmem:[%s3 + $0x7c] sm:$0xf]
        %v417 = vld [vmem:[%s4] sm:$0x1]
        %v419 = vlaneseq
        %v420 = vshrl.u32 %v419, 7
        %v421 = vsub.s32 0, %v420
        %v422 = vrot.slane %v417, %v421
        %v456 = vunpack.c.l.b16 %v385
        %v457 = vunpack.c.l.b16 %v386
        %v458 = vunpack.c.l.b16 %v387
        %v459 = vunpack.c.l.b16 %v388
        %v460 = vunpack.c.l.b16 %v389
        %v461 = vunpack.c.l.b16 %v390
        %v462 = vunpack.c.l.b16 %v391
        %v463 = vunpack.c.l.b16 %v392
        %v464 = vunpack.c.l.b16 %v393
        %v465 = vunpack.c.l.b16 %v394
        %v466 = vunpack.c.l.b16 %v395
        %v467 = vunpack.c.l.b16 %v396
        %v468 = vunpack.c.l.b16 %v397
        %v469 = vunpack.c.l.b16 %v398
        %v470 = vunpack.c.l.b16 %v399
        %v471 = vunpack.c.l.b16 %v400
        %v472 = vunpack.c.l.b16 %v401
        %v473 = vunpack.c.l.b16 %v402
        %v474 = vunpack.c.l.b16 %v403
        %v475 = vunpack.c.l.b16 %v404
        %v476 = vunpack.c.l.b16 %v405
        %v477 = vunpack.c.l.b16 %v406
        %v478 = vunpack.c.l.b16 %v407
        %v479 = vunpack.c.l.b16 %v408
        %v480 = vunpack.c.l.b16 %v409
        %v481 = vunpack.c.l.b16 %v410
        %v482 = vunpack.c.l.b16 %v411
        %v483 = vunpack.c.l.b16 %v412
        %v484 = vunpack.c.l.b16 %v413
        %v485 = vunpack.c.l.b16 %v414
        %v486 = vunpack.c.l.b16 %v415
        %v487 = vunpack.c.l.b16 %v416
        %v488 = vpack.c.b16 %v457, %v456
        %v489 = vpack.c.b16 %v459, %v458
        %v490 = vpack.c.b16 %v461, %v460
        %v491 = vpack.c.b16 %v463, %v462
        %v492 = vpack.c.b16 %v465, %v464
        %v493 = vpack.c.b16 %v467, %v466
        %v494 = vpack.c.b16 %v469, %v468
        %v495 = vpack.c.b16 %v471, %v470
        %v496 = vpack.c.b16 %v473, %v472
        %v497 = vpack.c.b16 %v475, %v474
        %v498 = vpack.c.b16 %v477, %v476
        %v499 = vpack.c.b16 %v479, %v478
        %v500 = vpack.c.b16 %v481, %v480
        %v501 = vpack.c.b16 %v483, %v482
        %v502 = vpack.c.b16 %v485, %v484
        %v503 = vpack.c.b16 %v487, %v486
        %520 = vmatprep.subr.bf16.mxu0 0
        %521 = vmatpush1.bf16.msra.mxu0 %v495
        %522 = vmatprep.subr.bf16.mxu0 0
        %523 = vmatpush1.bf16.msra.mxu0 %v494
        %524 = vmatprep.subr.bf16.mxu0 0
        %525 = vmatpush1.bf16.msra.mxu0 %v493
        %526 = vmatprep.subr.bf16.mxu0 0
        %527 = vmatpush1.bf16.msra.mxu0 %v492
        %528 = vmatprep.subr.bf16.mxu0 0
        %529 = vmatpush1.bf16.msra.mxu0 %v491
        %530 = vmatprep.subr.bf16.mxu0 0
        %531 = vmatpush1.bf16.msra.mxu0 %v490
        %532 = vmatprep.subr.bf16.mxu0 0
        %533 = vmatpush1.bf16.msra.mxu0 %v489
        %534 = vmatprep.subr.bf16.mxu0 0
        %535 = vmatpush1.bf16.msra.mxu0 %v488
        %536 = vmatprep.subr.bf16.mxu0 0
        %537 = vmatpush2.bf16.msra.mxu0 %v503
        %538 = vmatprep.subr.bf16.mxu0 0
        %539 = vmatpush2.bf16.msra.mxu0 %v502
        %540 = vmatprep.subr.bf16.mxu0 0
        %541 = vmatpush2.bf16.msra.mxu0 %v501
        %542 = vmatprep.subr.bf16.mxu0 0
        %543 = vmatpush2.bf16.msra.mxu0 %v500
        %544 = vmatprep.subr.bf16.mxu0 0
        %545 = vmatpush2.bf16.msra.mxu0 %v499
        %546 = vmatprep.subr.bf16.mxu0 0
        %547 = vmatpush2.bf16.msra.mxu0 %v498
        %548 = vmatprep.subr.bf16.mxu0 0
        %549 = vmatpush2.bf16.msra.mxu0 %v497
        %550 = vmatprep.subr.bf16.mxu0 0
        %551 = vmatpush2.bf16.msra.mxu0 %v496
        %552 = vmatprep.mubr.bf16.mxu0 %v384
        %553 = vmatmul.mubr.bf16.gmra.mxu0 %v383
        %v554 = vpop.f32.mrf.mxu0
        %v555 = vadd.f32 %v422, %v554
        %v556 = vpop.f32.mrf.mxu0
        %v557 = vpop.f32.mrf.mxu0
        %v558 = vpop.f32.mrf.mxu0
        %559 = vdwg.mxu0
        %v560 = vunpack.c.l.bf16 %v275
        %v561 = vadd.f32 %v555, %v560
        %v562 = vsel %vm336, %v561, 0.0
        %563 = vadd.xlane.f32.xlu0 %v562
        %v564 = vpop.xlane.xlu0 %563
        %v565 = vrcp.pop 64.0
        %v566 = vmul.f32 %v564, %v565
        %v567 = vmul.f32 %v561, %v561
        %v568 = vsel %vm336, %v567, 0.0
        %569 = vadd.xlane.f32.xlu0 %v568
        %v570 = vpop.xlane.xlu0 %569
        %v571 = vmul.f32 %v570, %v565
        %v572 = vmul.f32 %v566, %v566
        %v573 = vsub.f32 %v571, %v572
        %v574 = vadd.f32 %v573, 1e-05
        %v575 = vrsqrt.pop %v574
        %v576 = vld [vmem:[%s5] sm:$0x1]
        %v578 = vlaneseq
        %v579 = vshrl.u32 %v578, 7
        %v580 = vsub.s32 0, %v579
        %v581 = vrot.slane %v576, %v580
        %v583 = vmul.f32 %v575, %v581
        %v584 = vsub.f32 %v561, %v566
        %v585 = vmul.f32 %v584, %v583
        %v586 = vld [vmem:[%s6] sm:$0x1]
        %v588 = vlaneseq
        %v589 = vshrl.u32 %v588, 7
        %v590 = vsub.s32 0, %v589
        %v591 = vrot.slane %v586, %v590
        %v593 = vadd.f32 %v585, %v591
        %594 = vst.msk [vmem:[%s269] sm:$0xff] %vm336, %v593
        %s595 = sand.u32 %s181, 1
        %s596 = scalar_lea.sflag [#allocation3], %s595
        %s597 = sand.u32 %s181, 1
        %s598 = smul.addr %s597, 8
        %s599 = scalar_lea.vmem [#allocation2], %s598
        // Predicated region
        $region49: #{feed_forward.1} parent=47 // pred_check
          %p600 = pneg %p191
        $region50: #{feed_forward.1} parent=47 // pred_check_branch
          %602 = sbr.rel (%p600) target = $region52
        $region51: #{feed_forward.1} parent=47 // pred_region
          %s604 = ssub.s32 128, 128
          %605 = vsyncadd %s596, %s604
          %s606 = smul.addr %s21, 128
          %s607 = scalar_lea.hbm %s7, %s606
          %s609 = sshll.u32 %s599, 4
          %s610 = int_to_ptr.vmem [resolvable:$true] %s609
          %612 = dma.vmem_to_hbm [thread:$0]  %s610, 128, %s607, %s596
        $region52: #{feed_forward.1} parent=47 // pred_fallthru
          _
      $region48: #{feed_forward.1} parent=5 // pred_fallthru
        _
      %p613 = scmp.le.s32.totalorder 2, %s16
      // Predicated region
      $region53: #{feed_forward.1} parent=5 // pred_check
        %p614 = pneg %p613
      $region54: #{feed_forward.1} parent=5 // pred_check_branch
        %616 = sbr.rel (%p614) target = $region56
      $region55: #{feed_forward.1} parent=5 // pred_region
        %s617 = ssub.s32 %s16, 2
        // Predicated region
        $region57: #{feed_forward.1} parent=55 // pred_check
          %p618 = pneg %p197
        $region58: #{feed_forward.1} parent=55 // pred_check_branch
          %620 = sbr.rel (%p618) target = $region60
        $region59: #{feed_forward.1} parent=55 // pred_region
          %s621 = sand.u32 %s182, 1
          %s622 = scalar_lea.sflag [#allocation3], %s621
          %s623 = sand.u32 %s182, 1
          %s624 = smul.addr %s623, 8
          %s625 = scalar_lea.vmem [#allocation2], %s624
          %626 = dma.done %s622, 128
        $region60: #{feed_forward.1} parent=55 // pred_fallthru
          _
      $region56: #{feed_forward.1} parent=5 // pred_fallthru
        _
    $region6: #{feed_forward.1} parent=1 // loop_footer
      %s20 = sadd.s32 1, %s16
    $region7: #{feed_forward.1} parent=1 // loop_footer_branch
      %15 = sbr.rel target = $region3
    $region8: #{feed_forward.1} parent=1 // loop_exit
      _
    %627 = vsyncpa [#allocation3], 1
    %s628 = scalar_lea.sflag [#allocation3], 1
    %629 = vsyncpa %s628, 1

</llo_original>
